<compile_context>
chip_gen: v7x
topology: tpu7x:2x2x1
jax: 0.10.0
libtpu: 0.0.40
codegen_flags: <defaults>
</compile_context>

<pallas_src>
import functools

import jax
import jax.numpy as jnp
from jax.experimental import pallas as pl
from jax.experimental.pallas import tpu as pltpu


def _round_up(x, m):
    return ((x + m - 1) // m) * m


def _vq_kernel(cb_ref, cbsq_ref, emb_ref, qc_ref, qst_ref, idx_ref):
    cb = cb_ref[...].astype(jnp.float32)       # [K_pad, D_pad] (resident)
    cb_sq = cbsq_ref[...]                      # [1, K_pad] f32, +inf on padded rows
    e = emb_ref[...].astype(jnp.float32)       # [TB, D_pad]
    k_pad = cb.shape[0]

    # Expanded-L2 scores on the MXU: ||cb||^2 - 2 e.cb^T   (||e||^2 is constant
    # per row, so it does not affect the argmin).
    cross = jax.lax.dot_general(
        e, cb,
        dimension_numbers=(((1,), (1,)), ((), ())),
        preferred_element_type=jnp.float32,
    )                                          # [TB, K_pad]
    scores = cb_sq - 2.0 * cross               # [TB, K_pad]

    # argmin with first-occurrence tie-break (kthvalue(1) semantics).
    min_s = jnp.min(scores, axis=-1, keepdims=True)                       # [TB, 1]
    iota_k = jax.lax.broadcasted_iota(jnp.int32, scores.shape, 1)         # [TB, K_pad]
    idx = jnp.min(jnp.where(scores == min_s, iota_k, k_pad), axis=-1)     # [TB]
    # TODO(synk): NaN embeddings make `scores == min_s` all-false (idx -> k_pad,
    # q -> 0); add clamping / pl.debug_check if NaN inputs are possible.

    # Exact gather: one-hot (0/1) matmul against the f32 codebook on the MXU.
    onehot = (iota_k == idx[:, None]).astype(cb.dtype)                    # [TB, K_pad]
    q = jnp.dot(onehot, cb, preferred_element_type=jnp.float32).astype(qc_ref.dtype)

    # Single compute / cast, two stores (same vreg value).
    qc_ref[...] = q
    qst_ref[...] = q
    # Lane-dense index store: broadcast across 128 lanes, wrapper takes column 0.
    idx_ref[...] = jnp.broadcast_to(idx[:, None], idx_ref.shape).astype(jnp.int32)


def vector_quantize(codebook, embeddings, *, block_b=256):
    """codebook: [K, D], embeddings: [B, 1, D] -> (qc [B,D], qst [B,D], idx [B] int32)."""
    K, D = codebook.shape
    B = embeddings.shape[0]
    emb2d = embeddings.reshape(B, D)

    # Pad to MXU/lane-friendly shapes (zeros along D do not change dot products
    # or norms; padded K rows are masked via +inf squared norm).
    D_pad = _round_up(D, 128)
    K_pad = _round_up(K, 128)
    TB = _round_up(min(block_b, _round_up(B, 8)), 8)
    B_pad = _round_up(B, TB)

    cb_pad = jnp.zeros((K_pad, D_pad), codebook.dtype).at[:K, :D].set(codebook)
    cb_sq = jnp.sum(codebook.astype(jnp.float32) ** 2, axis=-1)            # [K]
    cb_sq_pad = jnp.full((1, K_pad), jnp.inf, jnp.float32).at[0, :K].set(cb_sq)
    emb_pad = jnp.zeros((B_pad, D_pad), embeddings.dtype).at[:B, :D].set(emb2d)

    # Rough VMEM budget: double-buffered resident + streamed blocks + temporaries.
    f32 = 4
    est = 2 * ((K_pad * D_pad + K_pad) * f32            # codebook + cb_sq
               + TB * D_pad * f32                       # embeddings block
               + 2 * TB * D_pad * f32 + TB * 128 * 4)   # output blocks
    est += 2 * TB * K_pad * f32                         # scores + onehot temporaries
    vmem_limit = int(min(max(2 * est, 16 * 1024 * 1024), 48 * 1024 * 1024))

    grid = (B_pad // TB,)
    qc, qst, idx_full = pl.pallas_call(
        _vq_kernel,
        grid=grid,
        in_specs=[
            pl.BlockSpec((K_pad, D_pad), lambda i: (0, 0)),   # codebook (resident)
            pl.BlockSpec((1, K_pad), lambda i: (0, 0)),       # ||cb||^2 (resident)
            pl.BlockSpec((TB, D_pad), lambda i: (i, 0)),      # embeddings (streamed)
        ],
        out_specs=(
            pl.BlockSpec((TB, D_pad), lambda i: (i, 0)),
            pl.BlockSpec((TB, D_pad), lambda i: (i, 0)),
            pl.BlockSpec((TB, 128), lambda i: (i, 0)),
        ),
        out_shape=(
            jax.ShapeDtypeStruct((B_pad, D_pad), codebook.dtype),
            jax.ShapeDtypeStruct((B_pad, D_pad), codebook.dtype),
            jax.ShapeDtypeStruct((B_pad, 128), jnp.int32),
        ),
        compiler_params=pltpu.CompilerParams(
            dimension_semantics=("parallel",),
            vmem_limit_bytes=vmem_limit,
        ),
    )(cb_pad, cb_sq_pad, emb_pad)

    return qc[:B, :D], qst[:B, :D], idx_full[:B, 0]
    # TODO(synk): backward (codebook-scatter grad / straight-through grad) is a
    # custom autograd rule, not part of the forward kernel.


def init_codebook(key, codebook_size, codebook_dims):
    # torch.nn.init.uniform_(codebook, -1, 1); codebook /= ||codebook||_2 (row-wise)
    cb = jax.random.uniform(key, (codebook_size, codebook_dims),
                            dtype=jnp.float32, minval=-1.0, maxval=1.0)
    cb = cb / jnp.linalg.norm(cb, axis=-1, keepdims=True)
    return cb


if __name__ == "__main__":
    B, K, D = 8, 16, 32          # batch, codebook_size, codebook_dims

    root = jax.random.PRNGKey(0)
    k_cb, k_emb = jax.random.split(root)
    codebook = init_codebook(k_cb, K, D)
    embeddings = jax.random.normal(k_emb, (B, 1, D), dtype=jnp.float32)

    qc, qst, idx = vector_quantize(codebook, embeddings)
    jax.block_until_ready((qc, qst, idx))

    # Pure-JAX reference check of the forward semantics.
    deltas_ref = embeddings - codebook[None, :, :]                    # [B, K, D]
    dist_ref = jnp.linalg.norm(deltas_ref, axis=-1)                   # [B, K]
    idx_ref = jnp.argmin(dist_ref, axis=-1)                           # [B]
    q_ref = codebook[idx_ref]                                         # [B, D]

    assert jnp.array_equal(idx, idx_ref.astype(jnp.int32)), "index mismatch"
    assert jnp.allclose(qc, q_ref), "quantized_codebook mismatch"
    assert jnp.allclose(qst, q_ref), "quantized_straight_through mismatch"

    print("KERNEL_OK")
</pallas_src>

<mosaic_0001>
module attributes {stable_mosaic.version = 11 : i64} {
  func.func @_vq_kernel(%arg0: i32, %arg1: memref<128x128xf32, #tpu.memory_space<vmem>>, %arg2: memref<1x128xf32, #tpu.memory_space<vmem>>, %arg3: memref<8x128xf32, #tpu.memory_space<vmem>>, %arg4: memref<8x128xf32, #tpu.memory_space<vmem>>, %arg5: memref<8x128xf32, #tpu.memory_space<vmem>>, %arg6: memref<8x128xi32, #tpu.memory_space<vmem>>) attributes {dimension_semantics = [#tpu.dimension_semantics<parallel>], iteration_bounds = array<i64: 1>, scalar_prefetch = 0 : i64, scratch_operands = 0 : i64, tpu.core_type = #tpu.core_type<tc>, window_params = [{pipeline_mode = #tpu.pipeline_mode<synchronous>, transform_indices = @transform_0, window_bounds = array<i64: 128, 128>}, {pipeline_mode = #tpu.pipeline_mode<synchronous>, transform_indices = @transform_1, window_bounds = array<i64: 1, 128>}, {transform_indices = @transform_2, window_bounds = array<i64: 8, 128>}, {transform_indices = @transform_3, window_bounds = array<i64: 8, 128>}, {transform_indices = @transform_4, window_bounds = array<i64: 8, 128>}, {transform_indices = @transform_5, window_bounds = array<i64: 8, 128>}]} {
    %c0 = arith.constant 0 : index
    %c0_0 = arith.constant 0 : index
    %0 = vector.load %arg1[%c0, %c0_0] : memref<128x128xf32, #tpu.memory_space<vmem>>, vector<128x128xf32>
    %c0_1 = arith.constant 0 : index
    %c0_2 = arith.constant 0 : index
    %1 = vector.load %arg2[%c0_1, %c0_2] : memref<1x128xf32, #tpu.memory_space<vmem>>, vector<1x128xf32>
    %c0_3 = arith.constant 0 : index
    %c0_4 = arith.constant 0 : index
    %2 = vector.load %arg3[%c0_3, %c0_4] : memref<8x128xf32, #tpu.memory_space<vmem>>, vector<8x128xf32>
    %cst = arith.constant dense<0.000000e+00> : vector<8x128xf32>
    %3 = tpu.matmul %2, %0, %cst {dimension_numbers = #tpu.dot_dimension_numbers<[1], [1], [0], [0], [0, 0, 1, 0], [], []>} : vector<8x128xf32>, vector<128x128xf32>, vector<8x128xf32> -> vector<8x128xf32>
    %cst_5 = arith.constant 2.000000e+00 : f32
    %4 = vector.broadcast %cst_5 : f32 to vector<8x128xf32>
    %5 = arith.mulf %4, %3 : vector<8x128xf32>
    %6 = vector.broadcast %1 : vector<1x128xf32> to vector<8x128xf32>
    %7 = arith.subf %6, %5 : vector<8x128xf32>
    %cst_6 = arith.constant dense<0x7F800000> : vector<8xf32>
    %8 = vector.multi_reduction <minimumf>, %7, %cst_6 [1] : vector<8x128xf32> to vector<8xf32>
    %9 = vector.shape_cast %8 : vector<8xf32> to vector<8x1xf32>
    %10 = tpu.iota {dimensions = array<i32: 1>} : vector<8x128xi32>
    %11 = vector.broadcast %9 : vector<8x1xf32> to vector<8x128xf32>
    %12 = arith.cmpf oeq, %7, %11 : vector<8x128xf32>
    %c128_i32 = arith.constant 128 : i32
    %13 = vector.broadcast %c128_i32 : i32 to vector<8x128xi32>
    %14 = arith.select %12, %10, %13 : vector<8x128xi1>, vector<8x128xi32>
    %cst_7 = arith.constant dense<2147483647> : vector<8xi32>
    %15 = vector.multi_reduction <minsi>, %14, %cst_7 [1] : vector<8x128xi32> to vector<8xi32>
    %16 = vector.shape_cast %15 : vector<8xi32> to vector<8x1xi32>
    %17 = vector.broadcast %16 : vector<8x1xi32> to vector<8x128xi32>
    %18 = arith.cmpi eq, %10, %17 : vector<8x128xi32>
    %19 = arith.extui %18 : vector<8x128xi1> to vector<8x128xi32>
    %20 = arith.sitofp %19 : vector<8x128xi32> to vector<8x128xf32>
    %cst_8 = arith.constant dense<0.000000e+00> : vector<8x128xf32>
    %21 = tpu.matmul %20, %0, %cst_8 {dimension_numbers = #tpu.dot_dimension_numbers<[1], [0], [0], [1], [0, 0, 1, 1], [], []>} : vector<8x128xf32>, vector<128x128xf32>, vector<8x128xf32> -> vector<8x128xf32>
    %c0_9 = arith.constant 0 : index
    %c0_10 = arith.constant 0 : index
    %22 = vector.load %arg4[%c0_9, %c0_10] : memref<8x128xf32, #tpu.memory_space<vmem>>, vector<8x128xf32>
    tpu.vector_store %arg4[%c0_9, %c0_10], %21 {strides = array<i32>} : memref<8x128xf32, #tpu.memory_space<vmem>>, vector<8x128xf32>,
    %c0_11 = arith.constant 0 : index
    %c0_12 = arith.constant 0 : index
    %23 = vector.load %arg5[%c0_11, %c0_12] : memref<8x128xf32, #tpu.memory_space<vmem>>, vector<8x128xf32>
    tpu.vector_store %arg5[%c0_11, %c0_12], %21 {strides = array<i32>} : memref<8x128xf32, #tpu.memory_space<vmem>>, vector<8x128xf32>,
    %24 = vector.shape_cast %15 : vector<8xi32> to vector<8x1xi32>
    %25 = vector.shape_cast %24 : vector<8x1xi32> to vector<8x1xi32>
    %26 = vector.broadcast %25 : vector<8x1xi32> to vector<8x128xi32>
    %c0_13 = arith.constant 0 : index
    %c0_14 = arith.constant 0 : index
    %27 = vector.load %arg6[%c0_13, %c0_14] : memref<8x128xi32, #tpu.memory_space<vmem>>, vector<8x128xi32>
    tpu.vector_store %arg6[%c0_13, %c0_14], %26 {strides = array<i32>} : memref<8x128xi32, #tpu.memory_space<vmem>>, vector<8x128xi32>,
    return
  }
  func.func @transform_0(%arg0: i32) -> (i32, i32) {
    %c0_i32 = arith.constant 0 : i32
    %c0_i32_0 = arith.constant 0 : i32
    %c0_i32_1 = arith.constant 0 : i32
    return %c0_i32, %c0_i32_0 : i32, i32
  }
  func.func @transform_1(%arg0: i32) -> (i32, i32) {
    %c0_i32 = arith.constant 0 : i32
    %c0_i32_0 = arith.constant 0 : i32
    %c0_i32_1 = arith.constant 0 : i32
    return %c0_i32, %c0_i32_0 : i32, i32
  }
  func.func @transform_2(%arg0: i32) -> (i32, i32) {
    %c0_i32 = arith.constant 0 : i32
    %c0_i32_0 = arith.constant 0 : i32
    return %arg0, %c0_i32 : i32, i32
  }
  func.func @transform_3(%arg0: i32) -> (i32, i32) {
    %c0_i32 = arith.constant 0 : i32
    %c0_i32_0 = arith.constant 0 : i32
    return %arg0, %c0_i32 : i32, i32
  }
  func.func @transform_4(%arg0: i32) -> (i32, i32) {
    %c0_i32 = arith.constant 0 : i32
    %c0_i32_0 = arith.constant 0 : i32
    return %arg0, %c0_i32 : i32, i32
  }
  func.func @transform_5(%arg0: i32) -> (i32, i32) {
    %c0_i32 = arith.constant 0 : i32
    %c0_i32_0 = arith.constant 0 : i32
    return %arg0, %c0_i32 : i32, i32
  }
}

</mosaic_0001>

<llo_original>
// kernel: tpu_custom_call.1
$region0: #{tpu_custom_call.1}
  #allocation0 [shape = 'u32[]', space=smem, size = 0x4, offset = 0x4, fixed_abs, tag = 'smem constant byte address 0x4 - core index']
  #allocation1 [shape = 'u32[144,128]{1,0:T(1,128)}', space=vmem, size = 0x12000, scoped, tag = 'internal scratch']
  %s0 = inlined_call_operand.hbm [shape: f32[128,128], index: 0, kind: input, shape index: {}]
  %s1 = inlined_call_operand.vmem [shape: f32[1,128], index: 1, kind: input, shape index: {}]
  %s2 = inlined_call_operand.hbm [shape: f32[8,128], index: 2, kind: input, shape index: {}]
  %s3 = inlined_call_operand.hbm [shape: f32[8,128], index: 3, kind: output, shape index: {0}]
  %s4 = inlined_call_operand.hbm [shape: f32[8,128], index: 4, kind: output, shape index: {1}]
  %s5 = inlined_call_operand.hbm [shape: s32[8,128], index: 5, kind: output, shape index: {2}]
  %6 = xla_tuple %s3, %s4, %s5
  %s7 = sld [smem:[#allocation0]]
  $region46: #{tpu_custom_call.1} parent=0
    _
  %s9 = ssub.s32 1, %s7
  %s10 = scalar_select 0, %s9, %s7
  $region1: #{tpu_custom_call.1} parent=0
    #allocation2 [shape = 'u8[65536]{0}', space=vmem, size = 0x10000, scoped, tag = 'input window, operand 0, single buffered']
    #allocation3 [shape = 's32[1]{0}', space=sflag, size = 0x4, scoped, tag = 'scoped memory for tpu_custom_call.1']
    #allocation4 [shape = 's32[1]{0}', space=sflag, size = 0x4, scoped, tag = 'scoped memory for tpu_custom_call.1']
    #allocation5 [shape = 'u8[4096]{0}', space=vmem, size = 0x1000, scoped, tag = 'input window, operand 2, single buffered']
    #allocation6 [shape = 's32[1]{0}', space=sflag, size = 0x4, scoped, tag = 'scoped memory for tpu_custom_call.1']
    #allocation7 [shape = 'u8[4096]{0}', space=vmem, size = 0x1000, scoped, tag = 'output window, operand 0, single buffered']
    #allocation8 [shape = 'u8[4096]{0}', space=vmem, size = 0x1000, scoped, tag = 'output window, operand 1, single buffered']
    #allocation9 [shape = 's32[1]{0}', space=sflag, size = 0x4, scoped, tag = 'scoped memory for tpu_custom_call.1']
    #allocation10 [shape = 'u8[4096]{0}', space=vmem, size = 0x1000, scoped, tag = 'output window, operand 2, single buffered']
    %11 = vsyncpa [#allocation3], 0
    %12 = vsyncpa [#allocation6], 0
    %13 = vsyncpa [#allocation4], 0
    %14 = vsyncpa [#allocation9], 0
    // Predicated region
    $region2: #{tpu_custom_call.1} parent=1 // pred_check
      _
    $region3: #{tpu_custom_call.1} parent=1 // pred_check_branch
      %16 = sbr.rel (0) target = $region5
    $region4: #{tpu_custom_call.1} parent=1 // pred_region
      %s18 = ssub.s32 2048, 2048
      %19 = vsyncadd [#allocation3], %s18
      %s20 = sshll.u32 [#allocation2], 4
      %s21 = int_to_ptr.vmem [resolvable:$true] %s20
      %26 = dma.hbm_to_vmem [thread:$0]  %s0, 2048, %s21, [#allocation3], 128, 128, 8
    $region5: #{tpu_custom_call.1} parent=1 // pred_fallthru
      _
    // Predicated region
    $region6: #{tpu_custom_call.1} parent=1 // pred_check
      _
    $region7: #{tpu_custom_call.1} parent=1 // pred_check_branch
      %28 = sbr.rel (0) target = $region9
    $region8: #{tpu_custom_call.1} parent=1 // pred_region
      _
    $region9: #{tpu_custom_call.1} parent=1 // pred_fallthru
      _
    // Predicated region
    $region10: #{tpu_custom_call.1} parent=1 // pred_check
      _
    $region11: #{tpu_custom_call.1} parent=1 // pred_check_branch
      %30 = sbr.rel (0) target = $region13
    $region12: #{tpu_custom_call.1} parent=1 // pred_region
      %s32 = ssub.s32 128, 128
      %33 = vsyncadd [#allocation6], %s32
      %s35 = sshll.u32 [#allocation5], 4
      %s36 = int_to_ptr.vmem [resolvable:$true] %s35
      %38 = dma.hbm_to_vmem [thread:$0]  %s2, 128, %s36, [#allocation6]
    $region13: #{tpu_custom_call.1} parent=1 // pred_fallthru
      _
    // Predicated region
    $region14: #{tpu_custom_call.1} parent=1 // pred_check
      _
    $region15: #{tpu_custom_call.1} parent=1 // pred_check_branch
      %40 = sbr.rel (0) target = $region17
    $region16: #{tpu_custom_call.1} parent=1 // pred_region
      %41 = dma.done [#allocation3], 2048
    $region17: #{tpu_custom_call.1} parent=1 // pred_fallthru
      _
    // Predicated region
    $region18: #{tpu_custom_call.1} parent=1 // pred_check
      _
    $region19: #{tpu_custom_call.1} parent=1 // pred_check_branch
      %43 = sbr.rel (0) target = $region21
    $region20: #{tpu_custom_call.1} parent=1 // pred_region
      %44 = dma.done [#allocation6], 128
    $region21: #{tpu_custom_call.1} parent=1 // pred_fallthru
      _
    %v45 = vld [vmem:[#allocation2] sm:$0xff]
    %v46 = vld [vmem:[#allocation2 + $0x8] sm:$0xff]
    %v47 = vld [vmem:[#allocation2 + $0x10] sm:$0xff]
    %v48 = vld [vmem:[#allocation2 + $0x18] sm:$0xff]
    %v49 = vld [vmem:[#allocation2 + $0x20] sm:$0xff]
    %v50 = vld [vmem:[#allocation2 + $0x28] sm:$0xff]
    %v51 = vld [vmem:[#allocation2 + $0x30] sm:$0xff]
    %v52 = vld [vmem:[#allocation2 + $0x38] sm:$0xff]
    %v53 = vld [vmem:[#allocation2 + $0x40] sm:$0xff]
    %v54 = vld [vmem:[#allocation2 + $0x48] sm:$0xff]
    %v55 = vld [vmem:[#allocation2 + $0x50] sm:$0xff]
    %v56 = vld [vmem:[#allocation2 + $0x58] sm:$0xff]
    %v57 = vld [vmem:[#allocation2 + $0x60] sm:$0xff]
    %v58 = vld [vmem:[#allocation2 + $0x68] sm:$0xff]
    %v59 = vld [vmem:[#allocation2 + $0x70] sm:$0xff]
    %v60 = vld [vmem:[#allocation2 + $0x78] sm:$0xff]
    %v61 = vld [vmem:[%s1] sm:$0x1]
    %v62 = vld [vmem:[#allocation5] sm:$0xff]
    %63 = vmatprep.subr.mxu0 0.0
    %64 = vmatpush1.xpose.msra.mxu0 %v45
    %65 = vmatprep.subr.mxu0 0.0
    %66 = vmatpush1.xpose.msra.mxu0 %v46
    %67 = vmatprep.subr.mxu0 0.0
    %68 = vmatpush1.xpose.msra.mxu0 %v47
    %69 = vmatprep.subr.mxu0 0.0
    %70 = vmatpush1.xpose.msra.mxu0 %v48
    %71 = vmatprep.subr.mxu0 0.0
    %72 = vmatpush1.xpose.msra.mxu0 %v49
    %73 = vmatprep.subr.mxu0 0.0
    %74 = vmatpush1.xpose.msra.mxu0 %v50
    %75 = vmatprep.subr.mxu0 0.0
    %76 = vmatpush1.xpose.msra.mxu0 %v51
    %77 = vmatprep.subr.mxu0 0.0
    %78 = vmatpush1.xpose.msra.mxu0 %v52
    %79 = vmatprep.subr.mxu0 0.0
    %80 = vmatpush1.xpose.msra.mxu0 %v53
    %81 = vmatprep.subr.mxu0 0.0
    %82 = vmatpush1.xpose.msra.mxu0 %v54
    %83 = vmatprep.subr.mxu0 0.0
    %84 = vmatpush1.xpose.msra.mxu0 %v55
    %85 = vmatprep.subr.mxu0 0.0
    %86 = vmatpush1.xpose.msra.mxu0 %v56
    %87 = vmatprep.subr.mxu0 0.0
    %88 = vmatpush1.xpose.msra.mxu0 %v57
    %89 = vmatprep.subr.mxu0 0.0
    %90 = vmatpush1.xpose.msra.mxu0 %v58
    %91 = vmatprep.subr.mxu0 0.0
    %92 = vmatpush1.xpose.msra.mxu0 %v59
    %93 = vmatprep.subr.mxu0 0.0
    %94 = vmatpush1.xpose.msra.mxu0 %v60
    %95 = vmatprep.subr.mxu0 0.0
    %96 = vmatpush1.xpose.msra.mxu0 0.0
    %97 = vmatprep.subr.mxu0 0.0
    %98 = vmatpush1.xpose.msra.mxu0 0.0
    %99 = vmatprep.subr.mxu0 0.0
    %100 = vmatpush1.xpose.msra.mxu0 0.0
    %101 = vmatprep.subr.mxu0 0.0
    %102 = vmatpush1.xpose.msra.mxu0 0.0
    %103 = vmatprep.subr.mxu0 0.0
    %104 = vmatpush1.xpose.msra.mxu0 0.0
    %105 = vmatprep.subr.mxu0 0.0
    %106 = vmatpush1.xpose.msra.mxu0 0.0
    %107 = vmatprep.subr.mxu0 0.0
    %108 = vmatpush1.xpose.msra.mxu0 0.0
    %109 = vmatprep.subr.mxu0 0.0
    %110 = vmatpush1.xpose.msra.mxu0 0.0
    %111 = vmatprep.subr.mxu0 0.0
    %112 = vmatpush1.xpose.msra.mxu0 0.0
    %113 = vmatprep.subr.mxu0 0.0
    %114 = vmatpush1.xpose.msra.mxu0 0.0
    %115 = vmatprep.subr.mxu0 0.0
    %116 = vmatpush1.xpose.msra.mxu0 0.0
    %117 = vmatprep.subr.mxu0 0.0
    %118 = vmatpush1.xpose.msra.mxu0 0.0
    %119 = vmatprep.subr.mxu0 0.0
    %120 = vmatpush1.xpose.msra.mxu0 0.0
    %121 = vmatprep.subr.mxu0 0.0
    %122 = vmatpush1.xpose.msra.mxu0 0.0
    %123 = vmatprep.subr.mxu0 0.0
    %124 = vmatpush1.xpose.msra.mxu0 0.0
    %125 = vmatprep.subr.mxu0 0.0
    %126 = vmatpush1.xpose.msra.mxu0 0.0
    %127 = vmatprep.mubr.f32.mxu0 0.0
    %128 = vmatmul.mubr.f32.gmra.mrb[0].mxu0 %v62
    %v129 = vpop.f32.mrb[0].mxu0
    %v130 = vadd.f32 0.0, %v129
    %v131 = vpop.f32.mrb[0].mxu0
    %132 = vdwg.mxu0
    %v133 = vmul.f32 %v130, 2.0
    %v135 = vlaneseq
    %v136 = vshrl.u32 %v135, 7
    %v137 = vsub.s32 0, %v136
    %v138 = vrot.slane %v61, %v137
    %v140 = vsub.f32 %v138, %v133
    %141 = vmin.xlane.f32.xlu0 %v140
    %v142 = vpop.xlane.xlu0 %141
    %v143 = vlaneseq
    %v144 = vand.u32 %v143, 127
    %vm145 = vcmp.eq.f32.partialorder %v140, %v142
    %v146 = vsel %vm145, %v144, 128
    %v147 = vand.u32 %v146, 65535
    %v148 = vshra.s32 %v146, 16
    %v149 = vcvt.s32.f32 %v147
    %v150 = vcvt.s32.f32 %v148
    %151 = vmin.xlane.f32.xlu0 %v150
    %v152 = vpop.xlane.xlu0 %151
    %vm153 = vcmp.eq.f32.partialorder %v150, %v152
    %v154 = vsel %vm153, %v149, inf
    %155 = vmin.xlane.f32.xlu0 %v154
    %v156 = vpop.xlane.xlu0 %155
    %v157 = vcvt.f32.s32 %v156
    %v158 = vcvt.f32.s32 %v152
    %v159 = vshll.u32 %v158, 16
    %v160 = vadd.s32 %v159, %v157
    %vm161 = vcmp.eq.s32.totalorder %v144, %v160
    %v162 = vsel %vm161, 1, 0
    %v163 = vcvt.s32.f32 %v162
    %164 = vmatprep.subr.mxu0 0.0
    %165 = vmatpush1.msra.mxu0 %v45
    %166 = vmatprep.subr.mxu0 0.0
    %167 = vmatpush1.msra.mxu0 %v46
    %168 = vmatprep.subr.mxu0 0.0
    %169 = vmatpush1.msra.mxu0 %v47
    %170 = vmatprep.subr.mxu0 0.0
    %171 = vmatpush1.msra.mxu0 %v48
    %172 = vmatprep.subr.mxu0 0.0
    %173 = vmatpush1.msra.mxu0 %v49
    %174 = vmatprep.subr.mxu0 0.0
    %175 = vmatpush1.msra.mxu0 %v50
    %176 = vmatprep.subr.mxu0 0.0
    %177 = vmatpush1.msra.mxu0 %v51
    %178 = vmatprep.subr.mxu0 0.0
    %179 = vmatpush1.msra.mxu0 %v52
    %180 = vmatprep.subr.mxu0 0.0
    %181 = vmatpush1.msra.mxu0 %v53
    %182 = vmatprep.subr.mxu0 0.0
    %183 = vmatpush1.msra.mxu0 %v54
    %184 = vmatprep.subr.mxu0 0.0
    %185 = vmatpush1.msra.mxu0 %v55
    %186 = vmatprep.subr.mxu0 0.0
    %187 = vmatpush1.msra.mxu0 %v56
    %188 = vmatprep.subr.mxu0 0.0
    %189 = vmatpush1.msra.mxu0 %v57
    %190 = vmatprep.subr.mxu0 0.0
    %191 = vmatpush1.msra.mxu0 %v58
    %192 = vmatprep.subr.mxu0 0.0
    %193 = vmatpush1.msra.mxu0 %v59
    %194 = vmatprep.subr.mxu0 0.0
    %195 = vmatpush1.msra.mxu0 %v60
    %196 = vmatprep.subr.mxu0 0.0
    %197 = vmatpush1.msra.mxu0 0.0
    %198 = vmatprep.subr.mxu0 0.0
    %199 = vmatpush1.msra.mxu0 0.0
    %200 = vmatprep.subr.mxu0 0.0
    %201 = vmatpush1.msra.mxu0 0.0
    %202 = vmatprep.subr.mxu0 0.0
    %203 = vmatpush1.msra.mxu0 0.0
    %204 = vmatprep.subr.mxu0 0.0
    %205 = vmatpush1.msra.mxu0 0.0
    %206 = vmatprep.subr.mxu0 0.0
    %207 = vmatpush1.msra.mxu0 0.0
    %208 = vmatprep.subr.mxu0 0.0
    %209 = vmatpush1.msra.mxu0 0.0
    %210 = vmatprep.subr.mxu0 0.0
    %211 = vmatpush1.msra.mxu0 0.0
    %212 = vmatprep.subr.mxu0 0.0
    %213 = vmatpush1.msra.mxu0 0.0
    %214 = vmatprep.subr.mxu0 0.0
    %215 = vmatpush1.msra.mxu0 0.0
    %216 = vmatprep.subr.mxu0 0.0
    %217 = vmatpush1.msra.mxu0 0.0
    %218 = vmatprep.subr.mxu0 0.0
    %219 = vmatpush1.msra.mxu0 0.0
    %220 = vmatprep.subr.mxu0 0.0
    %221 = vmatpush1.msra.mxu0 0.0
    %222 = vmatprep.subr.mxu0 0.0
    %223 = vmatpush1.msra.mxu0 0.0
    %224 = vmatprep.subr.mxu0 0.0
    %225 = vmatpush1.msra.mxu0 0.0
    %226 = vmatprep.subr.mxu0 0.0
    %227 = vmatpush1.msra.mxu0 0.0
    %228 = vmatprep.mubr.f32.mxu0 0.0
    %229 = vmatmul.mubr.f32.gmra.mrb[0].mxu0 %v163
    %v230 = vpop.f32.mrb[0].mxu0
    %v231 = vadd.f32 0.0, %v230
    %v232 = vpop.f32.mrb[0].mxu0
    %233 = vdwg.mxu0
    %234 = vst [vmem:[#allocation7] sm:$0xff] %v231
    %235 = vst [vmem:[#allocation8] sm:$0xff] %v231
    %236 = vst [vmem:[#allocation10] sm:$0xff] %v160
    // Predicated region
    $region22: #{tpu_custom_call.1} parent=1 // pred_check
      _
    $region23: #{tpu_custom_call.1} parent=1 // pred_check_branch
      %238 = sbr.rel (0) target = $region25
    $region24: #{tpu_custom_call.1} parent=1 // pred_region
      %s240 = ssub.s32 128, 128
      %241 = vsyncadd [#allocation4], %s240
      %s243 = sshll.u32 [#allocation7], 4
      %s244 = int_to_ptr.vmem [resolvable:$true] %s243
      %246 = dma.vmem_to_hbm [thread:$0]  %s244, 128, %s3, [#allocation4]
    $region25: #{tpu_custom_call.1} parent=1 // pred_fallthru
      _
    // Predicated region
    $region26: #{tpu_custom_call.1} parent=1 // pred_check
      _
    $region27: #{tpu_custom_call.1} parent=1 // pred_check_branch
      %248 = sbr.rel (0) target = $region29
    $region28: #{tpu_custom_call.1} parent=1 // pred_region
      %s250 = ssub.s32 128, 128
      %251 = vsyncadd [#allocation9], %s250
      %s253 = sshll.u32 [#allocation8], 4
      %s254 = int_to_ptr.vmem [resolvable:$true] %s253
      %256 = dma.vmem_to_hbm [thread:$0]  %s254, 128, %s4, [#allocation9]
    $region29: #{tpu_custom_call.1} parent=1 // pred_fallthru
      _
    // Predicated region
    $region30: #{tpu_custom_call.1} parent=1 // pred_check
      _
    $region31: #{tpu_custom_call.1} parent=1 // pred_check_branch
      %258 = sbr.rel (0) target = $region33
    $region32: #{tpu_custom_call.1} parent=1 // pred_region
      %s260 = ssub.s32 128, 128
      %261 = vsyncadd [#allocation9], %s260
      %s263 = sshll.u32 [#allocation10], 4
      %s264 = int_to_ptr.vmem [resolvable:$true] %s263
      %266 = dma.vmem_to_hbm [thread:$0]  %s264, 128, %s5, [#allocation9]
    $region33: #{tpu_custom_call.1} parent=1 // pred_fallthru
      _
    // Predicated region
    $region34: #{tpu_custom_call.1} parent=1 // pred_check
      _
    $region35: #{tpu_custom_call.1} parent=1 // pred_check_branch
      %268 = sbr.rel (0) target = $region37
    $region36: #{tpu_custom_call.1} parent=1 // pred_region
      %269 = dma.done [#allocation4], 128
    $region37: #{tpu_custom_call.1} parent=1 // pred_fallthru
      _
    // Predicated region
    $region38: #{tpu_custom_call.1} parent=1 // pred_check
      _
    $region39: #{tpu_custom_call.1} parent=1 // pred_check_branch
      %271 = sbr.rel (0) target = $region41
    $region40: #{tpu_custom_call.1} parent=1 // pred_region
      %272 = dma.done [#allocation9], 128
    $region41: #{tpu_custom_call.1} parent=1 // pred_fallthru
      _
    // Predicated region
    $region42: #{tpu_custom_call.1} parent=1 // pred_check
      _
    $region43: #{tpu_custom_call.1} parent=1 // pred_check_branch
      %274 = sbr.rel (0) target = $region45
    $region44: #{tpu_custom_call.1} parent=1 // pred_region
      %275 = dma.done [#allocation9], 128
    $region45: #{tpu_custom_call.1} parent=1 // pred_fallthru
      _
    %276 = vsyncpa [#allocation3], 1
    %277 = vsyncpa [#allocation6], 1
    %278 = vsyncpa [#allocation4], 1
    %279 = vsyncpa [#allocation9], 1

</llo_original>
